<compile_context>
chip_gen: v7x
topology: tpu7x:2x2x1
jax: 0.10.0
libtpu: 0.0.40
codegen_flags: <defaults>
</compile_context>

<pallas_src>
import jax
import jax.numpy as jnp
from jax import lax
from jax.experimental import pallas as pl
from jax.experimental.pallas import tpu as pltpu

FEATURES = 1000   # googlenet output logits size
EPS = 1e-12       # guards rsqrt against exact-zero rows (negligible otherwise)


def head_kernel(feat_ref, w_ref, b_ref, out_ref):
    # feat_ref: [TB, F]   w_ref: [F, D]   b_ref: [1, D]   out_ref: [TB, D]
    feat = feat_ref[...]
    w = w_ref[...]
    b = b_ref[...]
    # Linear layer: y = x @ W^T + b  (weight pre-transposed once in the wrapper,
    # f32 accumulation on the MXU).
    y = jnp.dot(feat, w, preferred_element_type=jnp.float32) + b
    # L2 normalize along dim=1: rsqrt runs on the EUP (free bundle slot),
    # the divide becomes a broadcasted multiply on the VPU.
    inv = lax.rsqrt(jnp.sum(y * y, axis=1, keepdims=True) + EPS)
    out_ref[...] = (y * inv).astype(out_ref.dtype)


def prepare_params(weight, bias):
    """One-time layout prep (hoisted out of the per-call hot path).

    weight: [dim, 1000] (PyTorch nn.Linear layout) -> [1000, dim]
    bias:   [dim]                                  -> [1, dim]
    """
    w_t = jnp.transpose(weight)
    b2 = bias.reshape(1, -1)
    return w_t, b2


def model_head(features, w_t, b2, *, block_b=1024):
    """features: [B, 1000] f32; w_t: [1000, dim] f32; b2: [1, dim] f32."""
    B, F = features.shape
    D = w_t.shape[1]

    # Batch tile: large lane-aligned tile when B is big (double-buffered stream);
    # full extent when B is small (block == full array dim satisfies the (8,128) rule).
    tb = block_b if B > block_b else B
    grid = (pl.cdiv(B, tb),)

    return pl.pallas_call(
        head_kernel,
        out_shape=jax.ShapeDtypeStruct((B, D), jnp.float32),
        grid=grid,
        in_specs=[
            # Feature tiles stream over the batch grid (double-buffered DMA).
            pl.BlockSpec((tb, F), lambda i: (i, 0)),
            # Weight and bias: constant index_map -> DMA'd once, VMEM-resident.
            pl.BlockSpec((F, D), lambda i: (0, 0)),
            pl.BlockSpec((1, D), lambda i: (0, 0)),
        ],
        out_specs=pl.BlockSpec((tb, D), lambda i: (i, 0)),
        compiler_params=pltpu.CompilerParams(
            # Batch axis is embarrassingly parallel -> megacore chips split it.
            dimension_semantics=("parallel",),
            # ~9 MiB worst case at tb=1024 (2x feature tile + weight + 2x output);
            # explicit limit gives headroom over the 16 MiB v5e scoped default while
            # staying well under every chip's physical VMEM.
            vmem_limit_bytes=48 * 1024 * 1024,
        ),
    )(features, w_t, b2)


def reference(features, weight, bias):
    y = features @ weight.T + bias
    n = jnp.sqrt(jnp.sum(y * y, axis=1, keepdims=True))
    return y / n


if __name__ == "__main__":
    B = 2
    dim = 64

    key = jax.random.PRNGKey(0)
    k_feat, k_w, k_b = jax.random.split(key, 3)

    # Stand-in for the googlenet(x) output logits (eval-mode path of the module).
    features = jax.random.normal(k_feat, (B, FEATURES), dtype=jnp.float32)

    # Deterministic Linear(1000, dim) parameters (PyTorch layout: weight [dim, 1000]).
    bound = 1.0 / (FEATURES ** 0.5)
    weight = jax.random.uniform(k_w, (dim, FEATURES), jnp.float32, -bound, bound)
    bias = jax.random.uniform(k_b, (dim,), jnp.float32, -bound, bound)

    # One-time parameter layout prep (kept out of the per-call path).
    w_t, b2 = prepare_params(weight, bias)

    out = model_head(features, w_t, b2)
    out = jax.block_until_ready(out)

    ref = reference(features, weight, bias)
    assert out.shape == (B, dim)
    assert jnp.allclose(out, ref, atol=1e-5, rtol=1e-5), "mismatch vs reference"

    print("KERNEL_OK")
</pallas_src>

<mosaic_0001>
module attributes {stable_mosaic.version = 11 : i64} {
  func.func @head_kernel(%arg0: i32, %arg1: memref<2x1000xf32, #tpu.memory_space<vmem>>, %arg2: memref<1000x64xf32, #tpu.memory_space<vmem>>, %arg3: memref<1x64xf32, #tpu.memory_space<vmem>>, %arg4: memref<2x64xf32, #tpu.memory_space<vmem>>) attributes {dimension_semantics = [#tpu.dimension_semantics<parallel>], iteration_bounds = array<i64: 1>, scalar_prefetch = 0 : i64, scratch_operands = 0 : i64, tpu.core_type = #tpu.core_type<tc>, window_params = [{transform_indices = @transform_0, window_bounds = array<i64: 2, 1000>}, {pipeline_mode = #tpu.pipeline_mode<synchronous>, transform_indices = @transform_1, window_bounds = array<i64: 1000, 64>}, {pipeline_mode = #tpu.pipeline_mode<synchronous>, transform_indices = @transform_2, window_bounds = array<i64: 1, 64>}, {transform_indices = @transform_3, window_bounds = array<i64: 2, 64>}]} {
    %c0 = arith.constant 0 : index
    %c0_0 = arith.constant 0 : index
    %0 = vector.load %arg1[%c0, %c0_0] : memref<2x1000xf32, #tpu.memory_space<vmem>>, vector<2x1000xf32>
    %c0_1 = arith.constant 0 : index
    %c0_2 = arith.constant 0 : index
    %1 = vector.load %arg2[%c0_1, %c0_2] : memref<1000x64xf32, #tpu.memory_space<vmem>>, vector<1000x64xf32>
    %c0_3 = arith.constant 0 : index
    %c0_4 = arith.constant 0 : index
    %2 = vector.load %arg3[%c0_3, %c0_4] : memref<1x64xf32, #tpu.memory_space<vmem>>, vector<1x64xf32>
    %cst = arith.constant dense<0.000000e+00> : vector<2x64xf32>
    %3 = tpu.matmul %0, %1, %cst {dimension_numbers = #tpu.dot_dimension_numbers<[1], [0], [0], [1], [0, 0, 1, 1], [], []>} : vector<2x1000xf32>, vector<1000x64xf32>, vector<2x64xf32> -> vector<2x64xf32>
    %4 = vector.broadcast %2 : vector<1x64xf32> to vector<2x64xf32>
    %5 = arith.addf %3, %4 : vector<2x64xf32>
    %6 = arith.mulf %5, %5 : vector<2x64xf32>
    %cst_5 = arith.constant dense<0.000000e+00> : vector<2xf32>
    %7 = vector.multi_reduction <add>, %6, %cst_5 [1] : vector<2x64xf32> to vector<2xf32>
    %8 = vector.shape_cast %7 : vector<2xf32> to vector<2x1xf32>
    %cst_6 = arith.constant 9.99999996E-13 : f32
    %9 = vector.broadcast %cst_6 : f32 to vector<2x1xf32>
    %10 = arith.addf %8, %9 : vector<2x1xf32>
    %11 = math.rsqrt %10 : vector<2x1xf32>
    %12 = vector.broadcast %11 : vector<2x1xf32> to vector<2x64xf32>
    %13 = arith.mulf %5, %12 : vector<2x64xf32>
    %c0_7 = arith.constant 0 : index
    %c0_8 = arith.constant 0 : index
    %14 = vector.load %arg4[%c0_7, %c0_8] : memref<2x64xf32, #tpu.memory_space<vmem>>, vector<2x64xf32>
    tpu.vector_store %arg4[%c0_7, %c0_8], %13 {strides = array<i32>} : memref<2x64xf32, #tpu.memory_space<vmem>>, vector<2x64xf32>,
    return
  }
  func.func @transform_0(%arg0: i32) -> (i32, i32) {
    %c0_i32 = arith.constant 0 : i32
    %c0_i32_0 = arith.constant 0 : i32
    return %arg0, %c0_i32 : i32, i32
  }
  func.func @transform_1(%arg0: i32) -> (i32, i32) {
    %c0_i32 = arith.constant 0 : i32
    %c0_i32_0 = arith.constant 0 : i32
    %c0_i32_1 = arith.constant 0 : i32
    return %c0_i32, %c0_i32_0 : i32, i32
  }
  func.func @transform_2(%arg0: i32) -> (i32, i32) {
    %c0_i32 = arith.constant 0 : i32
    %c0_i32_0 = arith.constant 0 : i32
    %c0_i32_1 = arith.constant 0 : i32
    return %c0_i32, %c0_i32_0 : i32, i32
  }
  func.func @transform_3(%arg0: i32) -> (i32, i32) {
    %c0_i32 = arith.constant 0 : i32
    %c0_i32_0 = arith.constant 0 : i32
    return %arg0, %c0_i32 : i32, i32
  }
}

</mosaic_0001>

<llo_original>
// kernel: tpu_custom_call.1
$region0: #{tpu_custom_call.1}
  #allocation0 [shape = 'u32[]', space=smem, size = 0x4, offset = 0x4, fixed_abs, tag = 'smem constant byte address 0x4 - core index']
  #allocation1 [shape = 'u32[144,128]{1,0:T(1,128)}', space=vmem, size = 0x12000, scoped, tag = 'internal scratch']
  %s0 = inlined_call_operand.vmem [shape: f32[2,1000], index: 0, kind: input, shape index: {}]
  %s1 = inlined_call_operand.vmem [shape: f32[1000,64], index: 1, kind: input, shape index: {}]
  %s2 = inlined_call_operand.vmem [shape: f32[1,64], index: 2, kind: input, shape index: {}]
  %s3 = inlined_call_operand.hbm [shape: f32[2,64], index: 3, kind: output, shape index: {}]
  %s4 = sld [smem:[#allocation0]]
  $region22: #{tpu_custom_call.1} parent=0
    _
  %s6 = ssub.s32 1, %s4
  %s7 = scalar_select 0, %s6, %s4
  $region1: #{tpu_custom_call.1} parent=0
    #allocation2 [shape = 'u8[1024]{0}', space=vmem, size = 0x400, scoped, tag = 'output window, operand 0, single buffered']
    #allocation3 [shape = 's32[1]{0}', space=sflag, size = 0x4, scoped, tag = 'scoped memory for tpu_custom_call.1']
    %8 = vsyncpa [#allocation3], 0
    // Predicated region
    $region2: #{tpu_custom_call.1} parent=1 // pred_check
      _
    $region3: #{tpu_custom_call.1} parent=1 // pred_check_branch
      %10 = sbr.rel (0) target = $region5
    $region4: #{tpu_custom_call.1} parent=1 // pred_region
      _
    $region5: #{tpu_custom_call.1} parent=1 // pred_fallthru
      _
    // Predicated region
    $region6: #{tpu_custom_call.1} parent=1 // pred_check
      _
    $region7: #{tpu_custom_call.1} parent=1 // pred_check_branch
      %12 = sbr.rel (0) target = $region9
    $region8: #{tpu_custom_call.1} parent=1 // pred_region
      _
    $region9: #{tpu_custom_call.1} parent=1 // pred_fallthru
      _
    // Predicated region
    $region10: #{tpu_custom_call.1} parent=1 // pred_check
      _
    $region11: #{tpu_custom_call.1} parent=1 // pred_check_branch
      %14 = sbr.rel (0) target = $region13
    $region12: #{tpu_custom_call.1} parent=1 // pred_region
      _
    $region13: #{tpu_custom_call.1} parent=1 // pred_fallthru
      _
    %v15 = vld [vmem:[%s0] sm:$0xff]
    %v16 = vld [vmem:[%s0 + $0x8] sm:$0xff]
    %v17 = vld [vmem:[%s1] sm:$0xff]
    %v18 = vld [vmem:[%s1 + $0x8] sm:$0xff]
    %v19 = vld [vmem:[%s1 + $0x10] sm:$0xff]
    %v20 = vld [vmem:[%s1 + $0x18] sm:$0xff]
    %v21 = vld [vmem:[%s1 + $0x20] sm:$0xff]
    %v22 = vld [vmem:[%s1 + $0x28] sm:$0xff]
    %v23 = vld [vmem:[%s1 + $0x30] sm:$0xff]
    %v24 = vld [vmem:[%s1 + $0x38] sm:$0xff]
    %v25 = vld [vmem:[%s1 + $0x40] sm:$0xff]
    %v26 = vld [vmem:[%s1 + $0x48] sm:$0xff]
    %v27 = vld [vmem:[%s1 + $0x50] sm:$0xff]
    %v28 = vld [vmem:[%s1 + $0x58] sm:$0xff]
    %v29 = vld [vmem:[%s1 + $0x60] sm:$0xff]
    %v30 = vld [vmem:[%s1 + $0x68] sm:$0xff]
    %v31 = vld [vmem:[%s1 + $0x70] sm:$0xff]
    %v32 = vld [vmem:[%s1 + $0x78] sm:$0xff]
    %v33 = vld [vmem:[%s1 + $0x80] sm:$0xff]
    %v34 = vld [vmem:[%s1 + $0x88] sm:$0xff]
    %v35 = vld [vmem:[%s1 + $0x90] sm:$0xff]
    %v36 = vld [vmem:[%s1 + $0x98] sm:$0xff]
    %v37 = vld [vmem:[%s1 + $0xa0] sm:$0xff]
    %v38 = vld [vmem:[%s1 + $0xa8] sm:$0xff]
    %v39 = vld [vmem:[%s1 + $0xb0] sm:$0xff]
    %v40 = vld [vmem:[%s1 + $0xb8] sm:$0xff]
    %v41 = vld [vmem:[%s1 + $0xc0] sm:$0xff]
    %v42 = vld [vmem:[%s1 + $0xc8] sm:$0xff]
    %v43 = vld [vmem:[%s1 + $0xd0] sm:$0xff]
    %v44 = vld [vmem:[%s1 + $0xd8] sm:$0xff]
    %v45 = vld [vmem:[%s1 + $0xe0] sm:$0xff]
    %v46 = vld [vmem:[%s1 + $0xe8] sm:$0xff]
    %v47 = vld [vmem:[%s1 + $0xf0] sm:$0xff]
    %v48 = vld [vmem:[%s1 + $0xf8] sm:$0xff]
    %v49 = vld [vmem:[%s1 + $0x100] sm:$0xff]
    %v50 = vld [vmem:[%s1 + $0x108] sm:$0xff]
    %v51 = vld [vmem:[%s1 + $0x110] sm:$0xff]
    %v52 = vld [vmem:[%s1 + $0x118] sm:$0xff]
    %v53 = vld [vmem:[%s1 + $0x120] sm:$0xff]
    %v54 = vld [vmem:[%s1 + $0x128] sm:$0xff]
    %v55 = vld [vmem:[%s1 + $0x130] sm:$0xff]
    %v56 = vld [vmem:[%s1 + $0x138] sm:$0xff]
    %v57 = vld [vmem:[%s1 + $0x140] sm:$0xff]
    %v58 = vld [vmem:[%s1 + $0x148] sm:$0xff]
    %v59 = vld [vmem:[%s1 + $0x150] sm:$0xff]
    %v60 = vld [vmem:[%s1 + $0x158] sm:$0xff]
    %v61 = vld [vmem:[%s1 + $0x160] sm:$0xff]
    %v62 = vld [vmem:[%s1 + $0x168] sm:$0xff]
    %v63 = vld [vmem:[%s1 + $0x170] sm:$0xff]
    %v64 = vld [vmem:[%s1 + $0x178] sm:$0xff]
    %v65 = vld [vmem:[%s1 + $0x180] sm:$0xff]
    %v66 = vld [vmem:[%s1 + $0x188] sm:$0xff]
    %v67 = vld [vmem:[%s1 + $0x190] sm:$0xff]
    %v68 = vld [vmem:[%s1 + $0x198] sm:$0xff]
    %v69 = vld [vmem:[%s1 + $0x1a0] sm:$0xff]
    %v70 = vld [vmem:[%s1 + $0x1a8] sm:$0xff]
    %v71 = vld [vmem:[%s1 + $0x1b0] sm:$0xff]
    %v72 = vld [vmem:[%s1 + $0x1b8] sm:$0xff]
    %v73 = vld [vmem:[%s1 + $0x1c0] sm:$0xff]
    %v74 = vld [vmem:[%s1 + $0x1c8] sm:$0xff]
    %v75 = vld [vmem:[%s1 + $0x1d0] sm:$0xff]
    %v76 = vld [vmem:[%s1 + $0x1d8] sm:$0xff]
    %v77 = vld [vmem:[%s1 + $0x1e0] sm:$0xff]
    %v78 = vld [vmem:[%s1 + $0x1e8] sm:$0xff]
    %v79 = vld [vmem:[%s1 + $0x1f0] sm:$0xff]
    %v80 = vld [vmem:[%s1 + $0x1f8] sm:$0xff]
    %v81 = vld [vmem:[%s1 + $0x200] sm:$0xff]
    %v82 = vld [vmem:[%s1 + $0x208] sm:$0xff]
    %v83 = vld [vmem:[%s1 + $0x210] sm:$0xff]
    %v84 = vld [vmem:[%s1 + $0x218] sm:$0xff]
    %v85 = vld [vmem:[%s1 + $0x220] sm:$0xff]
    %v86 = vld [vmem:[%s1 + $0x228] sm:$0xff]
    %v87 = vld [vmem:[%s1 + $0x230] sm:$0xff]
    %v88 = vld [vmem:[%s1 + $0x238] sm:$0xff]
    %v89 = vld [vmem:[%s1 + $0x240] sm:$0xff]
    %v90 = vld [vmem:[%s1 + $0x248] sm:$0xff]
    %v91 = vld [vmem:[%s1 + $0x250] sm:$0xff]
    %v92 = vld [vmem:[%s1 + $0x258] sm:$0xff]
    %v93 = vld [vmem:[%s1 + $0x260] sm:$0xff]
    %v94 = vld [vmem:[%s1 + $0x268] sm:$0xff]
    %v95 = vld [vmem:[%s1 + $0x270] sm:$0xff]
    %v96 = vld [vmem:[%s1 + $0x278] sm:$0xff]
    %v97 = vld [vmem:[%s1 + $0x280] sm:$0xff]
    %v98 = vld [vmem:[%s1 + $0x288] sm:$0xff]
    %v99 = vld [vmem:[%s1 + $0x290] sm:$0xff]
    %v100 = vld [vmem:[%s1 + $0x298] sm:$0xff]
    %v101 = vld [vmem:[%s1 + $0x2a0] sm:$0xff]
    %v102 = vld [vmem:[%s1 + $0x2a8] sm:$0xff]
    %v103 = vld [vmem:[%s1 + $0x2b0] sm:$0xff]
    %v104 = vld [vmem:[%s1 + $0x2b8] sm:$0xff]
    %v105 = vld [vmem:[%s1 + $0x2c0] sm:$0xff]
    %v106 = vld [vmem:[%s1 + $0x2c8] sm:$0xff]
    %v107 = vld [vmem:[%s1 + $0x2d0] sm:$0xff]
    %v108 = vld [vmem:[%s1 + $0x2d8] sm:$0xff]
    %v109 = vld [vmem:[%s1 + $0x2e0] sm:$0xff]
    %v110 = vld [vmem:[%s1 + $0x2e8] sm:$0xff]
    %v111 = vld [vmem:[%s1 + $0x2f0] sm:$0xff]
    %v112 = vld [vmem:[%s1 + $0x2f8] sm:$0xff]
    %v113 = vld [vmem:[%s1 + $0x300] sm:$0xff]
    %v114 = vld [vmem:[%s1 + $0x308] sm:$0xff]
    %v115 = vld [vmem:[%s1 + $0x310] sm:$0xff]
    %v116 = vld [vmem:[%s1 + $0x318] sm:$0xff]
    %v117 = vld [vmem:[%s1 + $0x320] sm:$0xff]
    %v118 = vld [vmem:[%s1 + $0x328] sm:$0xff]
    %v119 = vld [vmem:[%s1 + $0x330] sm:$0xff]
    %v120 = vld [vmem:[%s1 + $0x338] sm:$0xff]
    %v121 = vld [vmem:[%s1 + $0x340] sm:$0xff]
    %v122 = vld [vmem:[%s1 + $0x348] sm:$0xff]
    %v123 = vld [vmem:[%s1 + $0x350] sm:$0xff]
    %v124 = vld [vmem:[%s1 + $0x358] sm:$0xff]
    %v125 = vld [vmem:[%s1 + $0x360] sm:$0xff]
    %v126 = vld [vmem:[%s1 + $0x368] sm:$0xff]
    %v127 = vld [vmem:[%s1 + $0x370] sm:$0xff]
    %v128 = vld [vmem:[%s1 + $0x378] sm:$0xff]
    %v129 = vld [vmem:[%s1 + $0x380] sm:$0xff]
    %v130 = vld [vmem:[%s1 + $0x388] sm:$0xff]
    %v131 = vld [vmem:[%s1 + $0x390] sm:$0xff]
    %v132 = vld [vmem:[%s1 + $0x398] sm:$0xff]
    %v133 = vld [vmem:[%s1 + $0x3a0] sm:$0xff]
    %v134 = vld [vmem:[%s1 + $0x3a8] sm:$0xff]
    %v135 = vld [vmem:[%s1 + $0x3b0] sm:$0xff]
    %v136 = vld [vmem:[%s1 + $0x3b8] sm:$0xff]
    %v137 = vld [vmem:[%s1 + $0x3c0] sm:$0xff]
    %v138 = vld [vmem:[%s1 + $0x3c8] sm:$0xff]
    %v139 = vld [vmem:[%s1 + $0x3d0] sm:$0xff]
    %v140 = vld [vmem:[%s1 + $0x3d8] sm:$0xff]
    %v141 = vld [vmem:[%s1 + $0x3e0] sm:$0xff]
    %v142 = vld [vmem:[%s2] sm:$0x1]
    %v144 = vlaneseq
    %v145 = vshrl.u32 %v144, 7
    %v146 = vsub.s32 0, %v145
    %v147 = vrot.slane %v142, %v146
    %v151 = vcombine.high %v15, %v15
    %v153 = vunpack.c.l.s4 1983009808
    %v154 = vunpack.c.0.s8 %v153
    %v155 = vlaneseq
    %v156 = vshrl.u32 %v155, 7
    %v157 = vsub.s32 %v154, %v156
    %v158 = vrot.slane %v15, %v157
    %v160 = vunpack.c.l.s4 1983009808
    %v161 = vunpack.c.0.s8 %v160
    %v162 = vlaneseq
    %v163 = vshrl.u32 %v162, 7
    %v164 = vsub.s32 %v161, %v163
    %v165 = vrot.slane %v151, %v164
    %v166 = vcombine.high %v158, %v158
    %v167 = vcombine.high %v165, %v165
    %v168 = vcombine.high %v16, %v16
    %v170 = vunpack.c.l.s4 1983009808
    %v171 = vunpack.c.0.s8 %v170
    %v172 = vlaneseq
    %v173 = vshrl.u32 %v172, 7
    %v174 = vsub.s32 %v171, %v173
    %v175 = vrot.slane %v16, %v174
    %v177 = vunpack.c.l.s4 1983009808
    %v178 = vunpack.c.0.s8 %v177
    %v179 = vlaneseq
    %v180 = vshrl.u32 %v179, 7
    %v181 = vsub.s32 %v178, %v180
    %v182 = vrot.slane %v168, %v181
    %v183 = vcombine.high %v175, %v175
    %v184 = vcombine.high %v182, %v182
    %vm192 = vcmask 850944
    %v193 = vsel %vm192, %v184, 0
    %195 = vmatprep.subr.mxu0 0.0
    %196 = vmatpush1.msra.mxu0 %v17
    %197 = vmatprep.subr.mxu0 0.0
    %198 = vmatpush1.msra.mxu0 %v18
    %199 = vmatprep.subr.mxu0 0.0
    %200 = vmatpush1.msra.mxu0 %v19
    %201 = vmatprep.subr.mxu0 0.0
    %202 = vmatpush1.msra.mxu0 %v20
    %203 = vmatprep.subr.mxu0 0.0
    %204 = vmatpush1.msra.mxu0 %v21
    %205 = vmatprep.subr.mxu0 0.0
    %206 = vmatpush1.msra.mxu0 %v22
    %207 = vmatprep.subr.mxu0 0.0
    %208 = vmatpush1.msra.mxu0 %v23
    %209 = vmatprep.subr.mxu0 0.0
    %210 = vmatpush1.msra.mxu0 %v24
    %211 = vmatprep.subr.mxu0 0.0
    %212 = vmatpush1.msra.mxu0 %v25
    %213 = vmatprep.subr.mxu0 0.0
    %214 = vmatpush1.msra.mxu0 %v26
    %215 = vmatprep.subr.mxu0 0.0
    %216 = vmatpush1.msra.mxu0 %v27
    %217 = vmatprep.subr.mxu0 0.0
    %218 = vmatpush1.msra.mxu0 %v28
    %219 = vmatprep.subr.mxu0 0.0
    %220 = vmatpush1.msra.mxu0 %v29
    %221 = vmatprep.subr.mxu0 0.0
    %222 = vmatpush1.msra.mxu0 %v30
    %223 = vmatprep.subr.mxu0 0.0
    %224 = vmatpush1.msra.mxu0 %v31
    %225 = vmatprep.subr.mxu0 0.0
    %226 = vmatpush1.msra.mxu0 %v32
    %227 = vmatprep.subr.mxu0 0.0
    %228 = vmatpush1.msra.mxu0 %v33
    %229 = vmatprep.subr.mxu0 0.0
    %230 = vmatpush1.msra.mxu0 %v34
    %231 = vmatprep.subr.mxu0 0.0
    %232 = vmatpush1.msra.mxu0 %v35
    %233 = vmatprep.subr.mxu0 0.0
    %234 = vmatpush1.msra.mxu0 %v36
    %235 = vmatprep.subr.mxu0 0.0
    %236 = vmatpush1.msra.mxu0 %v37
    %237 = vmatprep.subr.mxu0 0.0
    %238 = vmatpush1.msra.mxu0 %v38
    %239 = vmatprep.subr.mxu0 0.0
    %240 = vmatpush1.msra.mxu0 %v39
    %241 = vmatprep.subr.mxu0 0.0
    %242 = vmatpush1.msra.mxu0 %v40
    %243 = vmatprep.subr.mxu0 0.0
    %244 = vmatpush1.msra.mxu0 %v41
    %245 = vmatprep.subr.mxu0 0.0
    %246 = vmatpush1.msra.mxu0 %v42
    %247 = vmatprep.subr.mxu0 0.0
    %248 = vmatpush1.msra.mxu0 %v43
    %249 = vmatprep.subr.mxu0 0.0
    %250 = vmatpush1.msra.mxu0 %v44
    %251 = vmatprep.subr.mxu0 0.0
    %252 = vmatpush1.msra.mxu0 %v45
    %253 = vmatprep.subr.mxu0 0.0
    %254 = vmatpush1.msra.mxu0 %v46
    %255 = vmatprep.subr.mxu0 0.0
    %256 = vmatpush1.msra.mxu0 %v47
    %257 = vmatprep.subr.mxu0 0.0
    %258 = vmatpush1.msra.mxu0 %v48
    %259 = vmatprep.mubr.f32.mxu0 %v166
    %260 = vmatmul.mubr.f32.gmra.mrb[0].mxu0 %v158
    %v261 = vpop.f32.mrb[0].mxu0
    %v262 = vadd.f32 %v147, %v261
    %v263 = vpop.f32.mrb[0].mxu0
    %264 = vdwg.mxu0
    %265 = vmatprep.subr.mxu0 0.0
    %266 = vmatpush1.msra.mxu0 %v49
    %267 = vmatprep.subr.mxu0 0.0
    %268 = vmatpush1.msra.mxu0 %v50
    %269 = vmatprep.subr.mxu0 0.0
    %270 = vmatpush1.msra.mxu0 %v51
    %271 = vmatprep.subr.mxu0 0.0
    %272 = vmatpush1.msra.mxu0 %v52
    %273 = vmatprep.subr.mxu0 0.0
    %274 = vmatpush1.msra.mxu0 %v53
    %275 = vmatprep.subr.mxu0 0.0
    %276 = vmatpush1.msra.mxu0 %v54
    %277 = vmatprep.subr.mxu0 0.0
    %278 = vmatpush1.msra.mxu0 %v55
    %279 = vmatprep.subr.mxu0 0.0
    %280 = vmatpush1.msra.mxu0 %v56
    %281 = vmatprep.subr.mxu0 0.0
    %282 = vmatpush1.msra.mxu0 %v57
    %283 = vmatprep.subr.mxu0 0.0
    %284 = vmatpush1.msra.mxu0 %v58
    %285 = vmatprep.subr.mxu0 0.0
    %286 = vmatpush1.msra.mxu0 %v59
    %287 = vmatprep.subr.mxu0 0.0
    %288 = vmatpush1.msra.mxu0 %v60
    %289 = vmatprep.subr.mxu0 0.0
    %290 = vmatpush1.msra.mxu0 %v61
    %291 = vmatprep.subr.mxu0 0.0
    %292 = vmatpush1.msra.mxu0 %v62
    %293 = vmatprep.subr.mxu0 0.0
    %294 = vmatpush1.msra.mxu0 %v63
    %295 = vmatprep.subr.mxu0 0.0
    %296 = vmatpush1.msra.mxu0 %v64
    %297 = vmatprep.subr.mxu0 0.0
    %298 = vmatpush1.msra.mxu0 %v65
    %299 = vmatprep.subr.mxu0 0.0
    %300 = vmatpush1.msra.mxu0 %v66
    %301 = vmatprep.subr.mxu0 0.0
    %302 = vmatpush1.msra.mxu0 %v67
    %303 = vmatprep.subr.mxu0 0.0
    %304 = vmatpush1.msra.mxu0 %v68
    %305 = vmatprep.subr.mxu0 0.0
    %306 = vmatpush1.msra.mxu0 %v69
    %307 = vmatprep.subr.mxu0 0.0
    %308 = vmatpush1.msra.mxu0 %v70
    %309 = vmatprep.subr.mxu0 0.0
    %310 = vmatpush1.msra.mxu0 %v71
    %311 = vmatprep.subr.mxu0 0.0
    %312 = vmatpush1.msra.mxu0 %v72
    %313 = vmatprep.subr.mxu0 0.0
    %314 = vmatpush1.msra.mxu0 %v73
    %315 = vmatprep.subr.mxu0 0.0
    %316 = vmatpush1.msra.mxu0 %v74
    %317 = vmatprep.subr.mxu0 0.0
    %318 = vmatpush1.msra.mxu0 %v75
    %319 = vmatprep.subr.mxu0 0.0
    %320 = vmatpush1.msra.mxu0 %v76
    %321 = vmatprep.subr.mxu0 0.0
    %322 = vmatpush1.msra.mxu0 %v77
    %323 = vmatprep.subr.mxu0 0.0
    %324 = vmatpush1.msra.mxu0 %v78
    %325 = vmatprep.subr.mxu0 0.0
    %326 = vmatpush1.msra.mxu0 %v79
    %327 = vmatprep.subr.mxu0 0.0
    %328 = vmatpush1.msra.mxu0 %v80
    %329 = vmatprep.mubr.f32.mxu0 %v167
    %330 = vmatmul.mubr.f32.gmra.mrb[0].mxu0 %v165
    %v331 = vpop.f32.mrb[0].mxu0
    %v332 = vadd.f32 %v262, %v331
    %v333 = vpop.f32.mrb[0].mxu0
    %334 = vdwg.mxu0
    %335 = vmatprep.subr.mxu0 0.0
    %336 = vmatpush1.msra.mxu0 %v81
    %337 = vmatprep.subr.mxu0 0.0
    %338 = vmatpush1.msra.mxu0 %v82
    %339 = vmatprep.subr.mxu0 0.0
    %340 = vmatpush1.msra.mxu0 %v83
    %341 = vmatprep.subr.mxu0 0.0
    %342 = vmatpush1.msra.mxu0 %v84
    %343 = vmatprep.subr.mxu0 0.0
    %344 = vmatpush1.msra.mxu0 %v85
    %345 = vmatprep.subr.mxu0 0.0
    %346 = vmatpush1.msra.mxu0 %v86
    %347 = vmatprep.subr.mxu0 0.0
    %348 = vmatpush1.msra.mxu0 %v87
    %349 = vmatprep.subr.mxu0 0.0
    %350 = vmatpush1.msra.mxu0 %v88
    %351 = vmatprep.subr.mxu0 0.0
    %352 = vmatpush1.msra.mxu0 %v89
    %353 = vmatprep.subr.mxu0 0.0
    %354 = vmatpush1.msra.mxu0 %v90
    %355 = vmatprep.subr.mxu0 0.0
    %356 = vmatpush1.msra.mxu0 %v91
    %357 = vmatprep.subr.mxu0 0.0
    %358 = vmatpush1.msra.mxu0 %v92
    %359 = vmatprep.subr.mxu0 0.0
    %360 = vmatpush1.msra.mxu0 %v93
    %361 = vmatprep.subr.mxu0 0.0
    %362 = vmatpush1.msra.mxu0 %v94
    %363 = vmatprep.subr.mxu0 0.0
    %364 = vmatpush1.msra.mxu0 %v95
    %365 = vmatprep.subr.mxu0 0.0
    %366 = vmatpush1.msra.mxu0 %v96
    %367 = vmatprep.subr.mxu0 0.0
    %368 = vmatpush1.msra.mxu0 %v97
    %369 = vmatprep.subr.mxu0 0.0
    %370 = vmatpush1.msra.mxu0 %v98
    %371 = vmatprep.subr.mxu0 0.0
    %372 = vmatpush1.msra.mxu0 %v99
    %373 = vmatprep.subr.mxu0 0.0
    %374 = vmatpush1.msra.mxu0 %v100
    %375 = vmatprep.subr.mxu0 0.0
    %376 = vmatpush1.msra.mxu0 %v101
    %377 = vmatprep.subr.mxu0 0.0
    %378 = vmatpush1.msra.mxu0 %v102
    %379 = vmatprep.subr.mxu0 0.0
    %380 = vmatpush1.msra.mxu0 %v103
    %381 = vmatprep.subr.mxu0 0.0
    %382 = vmatpush1.msra.mxu0 %v104
    %383 = vmatprep.subr.mxu0 0.0
    %384 = vmatpush1.msra.mxu0 %v105
    %385 = vmatprep.subr.mxu0 0.0
    %386 = vmatpush1.msra.mxu0 %v106
    %387 = vmatprep.subr.mxu0 0.0
    %388 = vmatpush1.msra.mxu0 %v107
    %389 = vmatprep.subr.mxu0 0.0
    %390 = vmatpush1.msra.mxu0 %v108
    %391 = vmatprep.subr.mxu0 0.0
    %392 = vmatpush1.msra.mxu0 %v109
    %393 = vmatprep.subr.mxu0 0.0
    %394 = vmatpush1.msra.mxu0 %v110
    %395 = vmatprep.subr.mxu0 0.0
    %396 = vmatpush1.msra.mxu0 %v111
    %397 = vmatprep.subr.mxu0 0.0
    %398 = vmatpush1.msra.mxu0 %v112
    %399 = vmatprep.mubr.f32.mxu0 %v183
    %400 = vmatmul.mubr.f32.gmra.mrb[0].mxu0 %v175
    %v401 = vpop.f32.mrb[0].mxu0
    %v402 = vadd.f32 %v332, %v401
    %v403 = vpop.f32.mrb[0].mxu0
    %404 = vdwg.mxu0
    %405 = vmatprep.subr.mxu0 0.0
    %406 = vmatpush1.msra.mxu0 %v113
    %407 = vmatprep.subr.mxu0 0.0
    %408 = vmatpush1.msra.mxu0 %v114
    %409 = vmatprep.subr.mxu0 0.0
    %410 = vmatpush1.msra.mxu0 %v115
    %411 = vmatprep.subr.mxu0 0.0
    %412 = vmatpush1.msra.mxu0 %v116
    %413 = vmatprep.subr.mxu0 0.0
    %414 = vmatpush1.msra.mxu0 %v117
    %415 = vmatprep.subr.mxu0 0.0
    %416 = vmatpush1.msra.mxu0 %v118
    %417 = vmatprep.subr.mxu0 0.0
    %418 = vmatpush1.msra.mxu0 %v119
    %419 = vmatprep.subr.mxu0 0.0
    %420 = vmatpush1.msra.mxu0 %v120
    %421 = vmatprep.subr.mxu0 0.0
    %422 = vmatpush1.msra.mxu0 %v121
    %423 = vmatprep.subr.mxu0 0.0
    %424 = vmatpush1.msra.mxu0 %v122
    %425 = vmatprep.subr.mxu0 0.0
    %426 = vmatpush1.msra.mxu0 %v123
    %427 = vmatprep.subr.mxu0 0.0
    %428 = vmatpush1.msra.mxu0 %v124
    %429 = vmatprep.subr.mxu0 0.0
    %430 = vmatpush1.msra.mxu0 %v125
    %431 = vmatprep.subr.mxu0 0.0
    %432 = vmatpush1.msra.mxu0 %v126
    %433 = vmatprep.subr.mxu0 0.0
    %434 = vmatpush1.msra.mxu0 %v127
    %435 = vmatprep.subr.mxu0 0.0
    %436 = vmatpush1.msra.mxu0 %v128
    %437 = vmatprep.subr.mxu0 0.0
    %438 = vmatpush1.msra.mxu0 %v129
    %439 = vmatprep.subr.mxu0 0.0
    %440 = vmatpush1.msra.mxu0 %v130
    %441 = vmatprep.subr.mxu0 0.0
    %442 = vmatpush1.msra.mxu0 %v131
    %443 = vmatprep.subr.mxu0 0.0
    %444 = vmatpush1.msra.mxu0 %v132
    %445 = vmatprep.subr.mxu0 0.0
    %446 = vmatpush1.msra.mxu0 %v133
    %447 = vmatprep.subr.mxu0 0.0
    %448 = vmatpush1.msra.mxu0 %v134
    %449 = vmatprep.subr.mxu0 0.0
    %450 = vmatpush1.msra.mxu0 %v135
    %451 = vmatprep.subr.mxu0 0.0
    %452 = vmatpush1.msra.mxu0 %v136
    %453 = vmatprep.subr.mxu0 0.0
    %454 = vmatpush1.msra.mxu0 %v137
    %455 = vmatprep.subr.mxu0 0.0
    %456 = vmatpush1.msra.mxu0 %v138
    %457 = vmatprep.subr.mxu0 0.0
    %458 = vmatpush1.msra.mxu0 %v139
    %459 = vmatprep.subr.mxu0 0.0
    %460 = vmatpush1.msra.mxu0 %v140
    %461 = vmatprep.subr.mxu0 0.0
    %462 = vmatpush1.msra.mxu0 %v141
    %463 = vmatprep.subr.mxu0 0.0
    %464 = vmatpush1.msra.mxu0 0.0
    %465 = vmatprep.subr.mxu0 0.0
    %466 = vmatpush1.msra.mxu0 0.0
    %467 = vmatprep.subr.mxu0 0.0
    %468 = vmatpush1.msra.mxu0 0.0
    %469 = vmatprep.mubr.f32.mxu0 %v193
    %470 = vmatmul.mubr.f32.gmra.mrb[0].mxu0 %v182
    %v471 = vpop.f32.mrb[0].mxu0
    %v472 = vadd.f32 %v402, %v471
    %v473 = vpop.f32.mrb[0].mxu0
    %474 = vdwg.mxu0
    %v475 = vmul.f32 %v472, %v472
    %vm476 = vcmask 517120
    %v477 = vsel %vm476, %v475, 0.0
    %478 = vadd.xlane.f32.xlu0 %v477
    %v479 = vpop.xlane.xlu0 %478
    %v480 = vadd.f32 %v479, 1e-12
    %v481 = vrsqrt.pop %v480
    %v482 = vmul.f32 %v472, %v481
    %483 = vst.msk [vmem:[#allocation2] sm:$0x3] %vm476, %v482
    // Predicated region
    $region14: #{tpu_custom_call.1} parent=1 // pred_check
      _
    $region15: #{tpu_custom_call.1} parent=1 // pred_check_branch
      %485 = sbr.rel (0) target = $region17
    $region16: #{tpu_custom_call.1} parent=1 // pred_region
      %s487 = ssub.s32 32, 32
      %488 = vsyncadd [#allocation3], %s487
      %s490 = sshll.u32 [#allocation2], 4
      %s491 = int_to_ptr.vmem [resolvable:$true] %s490
      %493 = dma.vmem_to_hbm [thread:$0]  %s491, 32, %s3, [#allocation3]
    $region17: #{tpu_custom_call.1} parent=1 // pred_fallthru
      _
    // Predicated region
    $region18: #{tpu_custom_call.1} parent=1 // pred_check
      _
    $region19: #{tpu_custom_call.1} parent=1 // pred_check_branch
      %495 = sbr.rel (0) target = $region21
    $region20: #{tpu_custom_call.1} parent=1 // pred_region
      %496 = dma.done [#allocation3], 32
    $region21: #{tpu_custom_call.1} parent=1 // pred_fallthru
      _
    %497 = vsyncpa [#allocation3], 1

</llo_original>
